<compile_context>
chip_gen: v6e
topology: v6e:2x2x1
jax: 0.10.0
libtpu: 0.0.40
codegen_flags: <defaults>
</compile_context>

<pallas_src>
import functools

import jax
import jax.numpy as jnp
from jax.experimental import pallas as pl
from jax.experimental.pallas import tpu as pltpu


# ---------------------------------------------------------------------------
# Tiling heuristics
# ---------------------------------------------------------------------------
_VMEM_TILE_BUDGET = 12 * 1024 * 1024   # in+out, double-buffered, per grid step
_TARGET_SEQ_TILE = 2048                # measured sweet spot for mem-bound copies
_TARGET_STEP_BYTES = 256 * 1024        # amortize per-grid-step overhead
_MAX_BATCH_FOLD = 8                    # bound static unroll in the fold kernel


def _pick_seq_tile(S, T, C, itemsize):
    """Largest legal seq tile: divides S, multiple of 128*T, fits VMEM budget."""
    full_bytes = 4 * C * S * itemsize              # 2 (in+out) x 2 (double buffer)
    if full_bytes <= _VMEM_TILE_BUDGET and S <= _TARGET_SEQ_TILE:
        return S
    quantum = 128 * T                              # keeps tS and tS//T lane-dense
    t = (min(_TARGET_SEQ_TILE, S) // quantum) * quantum
    while t >= quantum:
        if S % t == 0 and 4 * C * t * itemsize <= _VMEM_TILE_BUDGET:
            return t
        t -= quantum
    return S                                       # full dim is always a legal block


def _pick_batch_fold(B, block_elem_bytes):
    """Fold batch elements per step until a step moves >= _TARGET_STEP_BYTES."""
    best = 1
    for bb in range(1, min(B, _MAX_BATCH_FOLD) + 1):
        if B % bb:
            continue
        if 4 * bb * block_elem_bytes > _VMEM_TILE_BUDGET:
            break
        best = bb
        if 2 * bb * block_elem_bytes >= _TARGET_STEP_BYTES:
            break
    return best


# ---------------------------------------------------------------------------
# Kernels
# ---------------------------------------------------------------------------
def _transpose_kernel(x_ref, o_ref):
    # x_ref block: (bB, C, tS)  ->  o_ref block: (bB, tS, C)
    o_ref[...] = jnp.swapaxes(x_ref[...], 1, 2)


def _fold_kernel(x_ref, o_ref, *, timesteps_per_token):
    # x_ref block: (bB, C, tS)  ->  o_ref block: (bB, T*C, tS//T)
    # out[i, t*C + c, k] = x[i, c, k*T + t]  (local k; tiling over S commutes
    # with the fold because tS is a multiple of T).
    T = timesteps_per_token
    bB, C, tS = x_ref.shape
    K = tS // T
    # TODO(synk): the fold is a pure lane-restride
    # (out[:, t*C:(t+1)*C, :] = x[:, :, t::T]); Mosaic does not lower a
    # lane-strided pl.ds load, so we keep torch's exact
    # transpose -> contiguous reshape -> transpose chain per batch element.
    for i in range(bB):                  # static unroll; bB capped at _MAX_BATCH_FOLD
        y = x_ref[i].T                   # (tS, C)
        y = y.reshape(K, T * C)          # contiguous fold == torch .view
        o_ref[i] = y.T                   # (T*C, K)


# ---------------------------------------------------------------------------
# Wrapper
# ---------------------------------------------------------------------------
def no_encoder_forward(x, timesteps_per_token=1):
    """Pallas implementation of NoEncoder.forward.

    x: (B, C, S) or (B, C, F, S).
    Returns (B, S, C*F) if timesteps_per_token == 1,
            (B, C*F*T, S//T) otherwise.
    """
    if x.ndim == 4:
        # glue reshape, same as torch's input.view(bs, -1, seq); free in XLA
        x = x.reshape(x.shape[0], -1, x.shape[-1])
    B, C, S = x.shape
    T = int(timesteps_per_token)
    assert S % T == 0, "seq length must be divisible by timesteps_per_token"
    itemsize = jnp.dtype(x.dtype).itemsize

    tS = _pick_seq_tile(S, T, C, itemsize)
    bB = _pick_batch_fold(B, C * tS * itemsize)
    grid = (B // bB, S // tS)

    in_spec = pl.BlockSpec((bB, C, tS), lambda b, s: (b, 0, s))
    if T == 1:
        kernel = _transpose_kernel
        out_shape = jax.ShapeDtypeStruct((B, S, C), x.dtype)
        out_spec = pl.BlockSpec((bB, tS, C), lambda b, s: (b, s, 0))
    else:
        kernel = functools.partial(_fold_kernel, timesteps_per_token=T)
        out_shape = jax.ShapeDtypeStruct((B, C * T, S // T), x.dtype)
        out_spec = pl.BlockSpec((bB, C * T, tS // T), lambda b, s: (b, 0, s))

    bytes_accessed = 2 * B * C * S * itemsize      # pure data movement

    return pl.pallas_call(
        kernel,
        out_shape=out_shape,
        grid_spec=pltpu.PrefetchScalarGridSpec(
            num_scalar_prefetch=0,
            grid=grid,
            in_specs=[in_spec],
            out_specs=out_spec,
        ),
        compiler_params=pltpu.CompilerParams(
            dimension_semantics=("parallel", "parallel"),
            vmem_limit_bytes=32 * 1024 * 1024,
        ),
        cost_estimate=pl.CostEstimate(
            flops=0, transcendentals=0, bytes_accessed=bytes_accessed),
    )(x)


# ---------------------------------------------------------------------------
# Pure-JAX reference (mirrors the PyTorch code path)
# ---------------------------------------------------------------------------
def _no_encoder_ref(x, timesteps_per_token=1):
    if x.ndim == 4:
        x = x.reshape(x.shape[0], -1, x.shape[-1])
    T = timesteps_per_token
    if T == 1:
        return jnp.transpose(x, (0, 2, 1))
    B, C, S = x.shape
    y = jnp.transpose(x, (0, 2, 1)).reshape(B, S // T, T * C)
    return jnp.transpose(y, (0, 2, 1))


if __name__ == "__main__":
    key = jax.random.PRNGKey(0)
    # bs=2, input_channels=4, freq_bins=4, seq=16 (NoEncoder accepts 4-D input)
    x4 = jax.random.normal(key, (2, 4, 4, 16), dtype=jnp.float32)
    # 3-D variant: bs=2, channels=4, seq=16
    x3 = jax.random.normal(jax.random.fold_in(key, 1), (2, 4, 16), dtype=jnp.float32)
    # longer sequence to exercise the (batch-fold, seq-tile) grid path
    xl = jax.random.normal(jax.random.fold_in(key, 2), (2, 8, 4096), dtype=jnp.float32)

    checks = []

    # case 1: T == 1, 4-D input (freq-bin flatten) -> (B, S, C*F)
    o = jax.block_until_ready(no_encoder_forward(x4, timesteps_per_token=1))
    checks.append(o.shape == (2, 16, 16)
                  and bool(jnp.array_equal(o, _no_encoder_ref(x4, 1))))

    # case 2: T == 2, 4-D input -> (B, C*F*T, S//T)
    o = jax.block_until_ready(no_encoder_forward(x4, timesteps_per_token=2))
    checks.append(o.shape == (2, 32, 8)
                  and bool(jnp.array_equal(o, _no_encoder_ref(x4, 2))))

    # case 3: T == 2, 3-D input
    o = jax.block_until_ready(no_encoder_forward(x3, timesteps_per_token=2))
    checks.append(o.shape == (2, 8, 8)
                  and bool(jnp.array_equal(o, _no_encoder_ref(x3, 2))))

    # case 4: long sequence, T == 1 (tiled grid, batch folding)
    o = jax.block_until_ready(no_encoder_forward(xl, timesteps_per_token=1))
    checks.append(o.shape == (2, 4096, 8)
                  and bool(jnp.array_equal(o, _no_encoder_ref(xl, 1))))

    # case 5: long sequence, T == 4 (tiled fold path)
    o = jax.block_until_ready(no_encoder_forward(xl, timesteps_per_token=4))
    checks.append(o.shape == (2, 32, 1024)
                  and bool(jnp.array_equal(o, _no_encoder_ref(xl, 4))))

    if all(checks):
        print("KERNEL_OK")
    else:
        raise SystemExit("mismatch between Pallas kernel and reference")
</pallas_src>

<mosaic_0001>
module attributes {stable_mosaic.version = 11 : i64} {
  func.func @_transpose_kernel(%arg0: i32, %arg1: i32, %arg2: memref<2x16x16xf32, #tpu.memory_space<vmem>>, %arg3: memref<2x16x16xf32, #tpu.memory_space<vmem>>) attributes {dimension_semantics = [#tpu.dimension_semantics<parallel>, #tpu.dimension_semantics<parallel>], iteration_bounds = array<i64: 1, 1>, scalar_prefetch = 0 : i64, scratch_operands = 0 : i64, tpu.core_type = #tpu.core_type<tc>, window_params = [{transform_indices = @transform_0, window_bounds = array<i64: 2, 16, 16>}, {transform_indices = @transform_1, window_bounds = array<i64: 2, 16, 16>}]} {
    %c0 = arith.constant 0 : index
    %c0_0 = arith.constant 0 : index
    %c0_1 = arith.constant 0 : index
    %0 = vector.load %arg2[%c0, %c0_0, %c0_1] : memref<2x16x16xf32, #tpu.memory_space<vmem>>, vector<2x16x16xf32>
    %1 = tpu.transpose %0, [0, 2, 1] : vector<2x16x16xf32> -> vector<2x16x16xf32>
    %c0_2 = arith.constant 0 : index
    %c0_3 = arith.constant 0 : index
    %c0_4 = arith.constant 0 : index
    %2 = vector.load %arg3[%c0_2, %c0_3, %c0_4] : memref<2x16x16xf32, #tpu.memory_space<vmem>>, vector<2x16x16xf32>
    tpu.vector_store %arg3[%c0_2, %c0_3, %c0_4], %1 {strides = array<i32>} : memref<2x16x16xf32, #tpu.memory_space<vmem>>, vector<2x16x16xf32>,
    return
  }
  func.func @transform_0(%arg0: i32, %arg1: i32) -> (i32, i32, i32) {
    %c0_i32 = arith.constant 0 : i32
    %c0_i32_0 = arith.constant 0 : i32
    return %arg0, %c0_i32, %arg1 : i32, i32, i32
  }
  func.func @transform_1(%arg0: i32, %arg1: i32) -> (i32, i32, i32) {
    %c0_i32 = arith.constant 0 : i32
    %c0_i32_0 = arith.constant 0 : i32
    return %arg0, %arg1, %c0_i32 : i32, i32, i32
  }
}

</mosaic_0001>

<llo_original>
// kernel: tpu_custom_call.1
$region0: #{tpu_custom_call.1}
  #allocation0 [shape = 'u32[]', space=smem, size = 0x4, offset = 0x4, fixed_abs, tag = 'smem constant byte address 0x4 - core index']
  #allocation1 [shape = 'u32[144,128]{1,0:T(1,128)}', space=vmem, size = 0x12000, scoped, tag = 'internal scratch']
  %s0 = inlined_call_operand.hbm [shape: f32[2,16,16], index: 0, kind: input, shape index: {}]
  %s1 = inlined_call_operand.hbm [shape: f32[2,16,16], index: 1, kind: output, shape index: {}]
  %s2 = sld [smem:[#allocation0]]
  $region18: #{tpu_custom_call.1} parent=0
    _
  %s4 = ssub.s32 1, %s2
  %s5 = scalar_select 0, %s4, %s2
  $region1: #{tpu_custom_call.1} parent=0
    #allocation2 [shape = 'u8[16384]{0}', space=vmem, size = 0x4000, scoped, tag = 'input window, operand 0, single buffered']
    #allocation3 [shape = 's32[1]{0}', space=sflag, size = 0x4, scoped, tag = 'scoped memory for tpu_custom_call.1']
    #allocation4 [shape = 's32[1]{0}', space=sflag, size = 0x4, scoped, tag = 'scoped memory for tpu_custom_call.1']
    #allocation5 [shape = 'u8[16384]{0}', space=vmem, size = 0x4000, scoped, tag = 'output window, operand 0, single buffered']
    %6 = vsyncpa [#allocation3], 0
    %7 = vsyncpa [#allocation4], 0
    // Predicated region
    $region2: #{tpu_custom_call.1} parent=1 // pred_check
      _
    $region3: #{tpu_custom_call.1} parent=1 // pred_check_branch
      %9 = sbr.rel (0) target = $region5
    $region4: #{tpu_custom_call.1} parent=1 // pred_region
      %s11 = ssub.s32 512, 512
      %12 = vsyncadd [#allocation3], %s11
      %s13 = sshll.u32 [#allocation2], 4
      %s14 = int_to_ptr.vmem [resolvable:$true] %s13
      %19 = dma.hbm_to_vmem [thread:$0]  %s0, 512, %s14, [#allocation3], 128, 128, 8
    $region5: #{tpu_custom_call.1} parent=1 // pred_fallthru
      _
    // Predicated region
    $region6: #{tpu_custom_call.1} parent=1 // pred_check
      _
    $region7: #{tpu_custom_call.1} parent=1 // pred_check_branch
      %21 = sbr.rel (0) target = $region9
    $region8: #{tpu_custom_call.1} parent=1 // pred_region
      %22 = dma.done [#allocation3], 512
    $region9: #{tpu_custom_call.1} parent=1 // pred_fallthru
      _
    %v23 = vld [vmem:[#allocation2] sm:$0xff]
    %v24 = vld [vmem:[#allocation2 + $0x8] sm:$0xff]
    %v25 = vld [vmem:[#allocation2 + $0x10] sm:$0xff]
    %v26 = vld [vmem:[#allocation2 + $0x18] sm:$0xff]
    %27 = vxpose.xlu0.b32.start [1/16] %v23, 128
    %28 = vxpose.xlu0.b32.cont [2/16] %v24, 128
    %29 = vxpose.xlu0.b32.cont [3/16] 0.0, 128
    %30 = vxpose.xlu0.b32.cont [4/16] 0.0, 128
    %31 = vxpose.xlu0.b32.cont [5/16] 0.0, 128
    %32 = vxpose.xlu0.b32.cont [6/16] 0.0, 128
    %33 = vxpose.xlu0.b32.cont [7/16] 0.0, 128
    %34 = vxpose.xlu0.b32.cont [8/16] 0.0, 128
    %35 = vxpose.xlu0.b32.cont [9/16] 0.0, 128
    %36 = vxpose.xlu0.b32.cont [10/16] 0.0, 128
    %37 = vxpose.xlu0.b32.cont [11/16] 0.0, 128
    %38 = vxpose.xlu0.b32.cont [12/16] 0.0, 128
    %39 = vxpose.xlu0.b32.cont [13/16] 0.0, 128
    %40 = vxpose.xlu0.b32.cont [14/16] 0.0, 128
    %41 = vxpose.xlu0.b32.cont [15/16] 0.0, 128
    %42 = vxpose.xlu0.b32.end [16/16] 0.0, 128
    %v43 = vpop.trf.xlu0
    %v44 = vpop.trf.xlu0
    %v45 = vpop.trf.xlu0
    %v46 = vpop.trf.xlu0
    %v47 = vpop.trf.xlu0
    %v48 = vpop.trf.xlu0
    %v49 = vpop.trf.xlu0
    %v50 = vpop.trf.xlu0
    %v51 = vpop.trf.xlu0
    %v52 = vpop.trf.xlu0
    %v53 = vpop.trf.xlu0
    %v54 = vpop.trf.xlu0
    %v55 = vpop.trf.xlu0
    %v56 = vpop.trf.xlu0
    %v57 = vpop.trf.xlu0
    %v58 = vpop.trf.xlu0
    %59 = vxpose.xlu0.b32.start [1/16] %v25, 128
    %60 = vxpose.xlu0.b32.cont [2/16] %v26, 128
    %61 = vxpose.xlu0.b32.cont [3/16] 0.0, 128
    %62 = vxpose.xlu0.b32.cont [4/16] 0.0, 128
    %63 = vxpose.xlu0.b32.cont [5/16] 0.0, 128
    %64 = vxpose.xlu0.b32.cont [6/16] 0.0, 128
    %65 = vxpose.xlu0.b32.cont [7/16] 0.0, 128
    %66 = vxpose.xlu0.b32.cont [8/16] 0.0, 128
    %67 = vxpose.xlu0.b32.cont [9/16] 0.0, 128
    %68 = vxpose.xlu0.b32.cont [10/16] 0.0, 128
    %69 = vxpose.xlu0.b32.cont [11/16] 0.0, 128
    %70 = vxpose.xlu0.b32.cont [12/16] 0.0, 128
    %71 = vxpose.xlu0.b32.cont [13/16] 0.0, 128
    %72 = vxpose.xlu0.b32.cont [14/16] 0.0, 128
    %73 = vxpose.xlu0.b32.cont [15/16] 0.0, 128
    %74 = vxpose.xlu0.b32.end [16/16] 0.0, 128
    %v75 = vpop.trf.xlu0
    %v76 = vpop.trf.xlu0
    %v77 = vpop.trf.xlu0
    %v78 = vpop.trf.xlu0
    %v79 = vpop.trf.xlu0
    %v80 = vpop.trf.xlu0
    %v81 = vpop.trf.xlu0
    %v82 = vpop.trf.xlu0
    %v83 = vpop.trf.xlu0
    %v84 = vpop.trf.xlu0
    %v85 = vpop.trf.xlu0
    %v86 = vpop.trf.xlu0
    %v87 = vpop.trf.xlu0
    %v88 = vpop.trf.xlu0
    %v89 = vpop.trf.xlu0
    %v90 = vpop.trf.xlu0
    %vm91 = vcmask 130048
    %92 = vst.msk [vmem:[#allocation5] sm:$0xff] %vm91, %v43
    %93 = vst.msk [vmem:[#allocation5 + $0x8] sm:$0xff] %vm91, %v44
    %94 = vst.msk [vmem:[#allocation5 + $0x10] sm:$0xff] %vm91, %v75
    %95 = vst.msk [vmem:[#allocation5 + $0x18] sm:$0xff] %vm91, %v76
    // Predicated region
    $region10: #{tpu_custom_call.1} parent=1 // pred_check
      _
    $region11: #{tpu_custom_call.1} parent=1 // pred_check_branch
      %97 = sbr.rel (0) target = $region13
    $region12: #{tpu_custom_call.1} parent=1 // pred_region
      %s99 = ssub.s32 512, 512
      %100 = vsyncadd [#allocation4], %s99
      %s101 = sshll.u32 [#allocation5], 4
      %s102 = int_to_ptr.vmem [resolvable:$true] %s101
      %107 = dma.vmem_to_hbm [thread:$0]  %s102, 512, %s1, [#allocation4], 128, 128, 8
    $region13: #{tpu_custom_call.1} parent=1 // pred_fallthru
      _
    // Predicated region
    $region14: #{tpu_custom_call.1} parent=1 // pred_check
      _
    $region15: #{tpu_custom_call.1} parent=1 // pred_check_branch
      %109 = sbr.rel (0) target = $region17
    $region16: #{tpu_custom_call.1} parent=1 // pred_region
      %110 = dma.done [#allocation4], 512
    $region17: #{tpu_custom_call.1} parent=1 // pred_fallthru
      _
    %111 = vsyncpa [#allocation3], 1
    %112 = vsyncpa [#allocation4], 1

</llo_original>
